<compile_context>
chip_gen: v7x
topology: tpu7x:2x2x1
jax: 0.10.0
libtpu: 0.0.40
codegen_flags: <defaults>
</compile_context>

<pallas_src>
import functools

import jax
import jax.numpy as jnp
from jax import lax
from jax.experimental import pallas as pl
from jax.experimental.pallas import tpu as pltpu

_LANE = 128


def _round_up(a, b):
    return (a + b - 1) // b * b


def _vmem_capacity_bytes():
    """Physical VMEM per TensorCore (generation-aware), with a safe fallback."""
    try:
        cap = int(pltpu.get_tpu_info().vmem_capacity_bytes)
        if cap >= 32 * 1024 * 1024:
            return cap
    except Exception:
        pass
    return 64 * 1024 * 1024  # conservative: v7x per-core physical VMEM


def _choose_tile_hw(bn, c1, hw, x_itemsize, stream_budget_bytes, max_tile_hw=None):
    """Largest lane-multiple HW tile whose double-buffered stream fits budget."""
    per_lane = max(1, 2 * bn * c1 * x_itemsize)  # double-buffered bytes per lane
    max_lanes = (stream_budget_bytes // per_lane) // _LANE * _LANE
    tile = min(max(_LANE, max_lanes), _round_up(hw, _LANE))
    if max_tile_hw is not None:
        tile = min(tile, max(_LANE, (max_tile_hw // _LANE) * _LANE))
    return max(_LANE, tile)


def _classify_kernel(x_ref, w_ref, b_ref, o_ref, acc_ref, *, tile_hw, inv_hw,
                     num_chunks, chunks_per_split, last_chunk_valid):
    # x_ref : (bn, C1, tile_hw)  native dtype  (streamed, double-buffered)
    # w_ref : (C1, C2P)          constant block, single-buffered
    # b_ref : (1, C2P)           constant block, single-buffered (pre-scaled by 1/n_splits)
    # o_ref : (1, bn, C2P)       resident across the reduction axis (per split)
    # acc_ref: (bn, C1, 128) f32 scratch accumulator
    s = pl.program_id(0)                       # reduction-split index (v7x 2nd core)
    k = pl.program_id(2)                       # chunk index within this split
    g = s * chunks_per_split + k               # global chunk index along HW
    is_last_chunk = g == (num_chunks - 1)

    n_slabs = tile_hw // _LANE
    chunk = None
    for j in range(n_slabs):
        slab = x_ref[:, :, j * _LANE:(j + 1) * _LANE].astype(jnp.float32)
        # Statically known number of valid lanes of this sub-slab *if* this is
        # the last (possibly ragged / out-of-bounds) chunk of the HW axis.
        valid_if_last = max(0, min(_LANE, last_chunk_valid - j * _LANE))
        if valid_if_last < _LANE:
            if valid_if_last <= 0:
                keep = jnp.logical_not(is_last_chunk)
            else:
                lane = lax.broadcasted_iota(jnp.int32, slab.shape, 2)
                keep = jnp.logical_or(jnp.logical_not(is_last_chunk),
                                      lane < valid_if_last)
            slab = jnp.where(keep, slab, jnp.float32(0.0))
        chunk = slab if chunk is None else chunk + slab

    # First step of each (split, batch-tile): write directly (no init + RMW).
    @pl.when(k == 0)
    def _first():
        acc_ref[...] = chunk

    @pl.when(k != 0)
    def _accum():
        acc_ref[...] = acc_ref[...] + chunk

    @pl.when(k == chunks_per_split - 1)
    def _finalize():
        # Single cross-lane (XLU) reduce + scale, then MXU matmul + bias.
        pooled = jnp.sum(acc_ref[...], axis=-1) * jnp.float32(inv_hw)   # (bn, C1)
        out = jnp.dot(pooled, w_ref[...].astype(jnp.float32),
                      preferred_element_type=jnp.float32)               # (bn, C2P)
        out = out + b_ref[...].astype(jnp.float32)
        o_ref[...] = out[None].astype(o_ref.dtype)


def classify_forward(x_nchw, conv_weight, conv_bias, *, max_tile_hw=None):
    """Single-tensor path. x_nchw: (N, c1, H, W); conv_weight: (c2, c1, 1, 1)."""
    n, c1, h, w_sp = x_nchw.shape
    c2 = conv_weight.shape[0]
    hw = h * w_sp

    # Lane-dense padded output channels.
    c2p = _round_up(c2, _LANE)

    # Batch tile: largest divisor of n that is <= 8 (never the raw batch).
    bn = max(d for d in range(1, min(n, 8) + 1) if n % d == 0)
    batch_tiles = n // bn

    x_item = jnp.dtype(x_nchw.dtype).itemsize
    w_item = jnp.dtype(conv_weight.dtype).itemsize
    out_item = 4  # f32 partial outputs

    # --- Generation-aware VMEM budgeting ------------------------------------
    cap = _vmem_capacity_bytes()
    vmem_ceiling = min(3 * cap // 4, 96 * 1024 * 1024)   # ~48 MiB v7x, ~96 MiB v5e/v6e
    fixed = (c1 * c2p + c2p) * w_item                    # single-buffered weight + bias
    fixed += 2 * bn * c2p * out_item                     # output block (double-buffered)
    fixed += bn * c1 * _LANE * 4                         # f32 accumulator scratch
    headroom = 2 * 1024 * 1024
    stream_budget = min(vmem_ceiling // 2, vmem_ceiling - fixed - headroom)
    stream_budget = max(stream_budget, 2 * bn * c1 * _LANE * x_item)
    tile_hw = _choose_tile_hw(bn, c1, hw, x_item, stream_budget, max_tile_hw)

    num_chunks = pl.cdiv(hw, tile_hw)
    last_chunk_valid = hw - (num_chunks - 1) * tile_hw   # 1..tile_hw (static)

    # Split the HW reduction across two parallel grid slots when the batch grid
    # axis alone would leave a second TensorCore (v7x) idle.
    n_splits = 2 if (batch_tiles == 1 and num_chunks >= 2 and num_chunks % 2 == 0) else 1
    chunks_per_split = num_chunks // n_splits

    # Flatten spatial dims; NO pad of the reduction axis (tail masked in-kernel).
    x_flat = x_nchw.reshape(n, c1, hw)

    # 1x1 conv == dense matmul: weight (c2, c1, 1, 1) -> (c1, c2p), zero-padded.
    w_mat = conv_weight.reshape(c2, c1).T
    w_mat = jnp.pad(w_mat, ((0, 0), (0, c2p - c2)))
    # Bias is pre-scaled by 1/n_splits so the sum over partial outputs is exact.
    b_row = (jnp.pad(conv_bias, (0, c2p - c2)).astype(jnp.float32)
             / jnp.float32(n_splits)).reshape(1, c2p)

    vmem_est = fixed + 2 * bn * c1 * tile_hw * x_item + headroom
    vmem_limit = int(min(cap, max(vmem_ceiling, vmem_est)))

    grid = (n_splits, batch_tiles, chunks_per_split)

    kernel = functools.partial(
        _classify_kernel, tile_hw=tile_hw, inv_hw=1.0 / hw,
        num_chunks=num_chunks, chunks_per_split=chunks_per_split,
        last_chunk_valid=last_chunk_valid)

    def x_index_map(s, b, k):
        return (b, 0, s * chunks_per_split + k)

    # Memory-bound cost hint for XLA's scheduler.
    flops = int(2 * n * c1 * c2p * n_splits + n * c1 * hw)
    bytes_accessed = int(n * c1 * hw * x_item + (c1 * c2p + c2p) * w_item
                         + n_splits * n * c2p * out_item)

    out_padded = pl.pallas_call(
        kernel,
        out_shape=jax.ShapeDtypeStruct((n_splits, n, c2p), jnp.float32),
        grid_spec=pltpu.PrefetchScalarGridSpec(
            num_scalar_prefetch=0,
            grid=grid,
            in_specs=[
                pl.BlockSpec((bn, c1, tile_hw), x_index_map),
                pl.BlockSpec((c1, c2p), lambda s, b, k: (0, 0),
                             pipeline_mode=pl.Buffered(1)),
                pl.BlockSpec((1, c2p), lambda s, b, k: (0, 0),
                             pipeline_mode=pl.Buffered(1)),
            ],
            out_specs=pl.BlockSpec((1, bn, c2p), lambda s, b, k: (s, b, 0)),
            scratch_shapes=[pltpu.VMEM((bn, c1, _LANE), jnp.float32)],
        ),
        compiler_params=pltpu.CompilerParams(
            dimension_semantics=("parallel", "parallel", "arbitrary"),
            vmem_limit_bytes=vmem_limit,
        ),
        cost_estimate=pl.CostEstimate(
            flops=flops, transcendentals=0, bytes_accessed=bytes_accessed),
    )(x_flat, w_mat, b_row)

    out = out_padded.sum(axis=0) if n_splits > 1 else out_padded[0]
    return out[:, :c2].astype(x_nchw.dtype)


def classify_forward_module(x, conv_weight, conv_bias, **kw):
    """Full module semantics: `x` may be a single tensor or a list of feature
    maps; pooled channels are concatenated before the 1x1 conv.  Implemented as
    a sum of per-input projections with sliced weights (mathematically equal to
    conv(concat(pool(x_i)))); bias is applied once."""
    xs = x if isinstance(x, (list, tuple)) else [x]
    off = 0
    out = None
    for i, xi in enumerate(xs):
        ci = xi.shape[1]
        wi = conv_weight[:, off:off + ci, :, :]
        bi = conv_bias if i == 0 else jnp.zeros_like(conv_bias)
        yi = classify_forward(xi, wi, bi, **kw)
        out = yi if out is None else out + yi
        off += ci
    return out


def reference_forward(x, conv_weight, conv_bias):
    xs = x if isinstance(x, (list, tuple)) else [x]
    pooled = jnp.concatenate([jnp.mean(xi, axis=(2, 3)) for xi in xs], axis=1)
    w_mat = conv_weight.reshape(conv_weight.shape[0], -1)
    return pooled @ w_mat.T + conv_bias[None, :]


def _make_case(key, n, c1, h, w, c2, dtype=jnp.float32):
    kx, kw, kb = jax.random.split(key, 3)
    x = jax.random.normal(kx, (n, c1, h, w), dtype)
    bound = 1.0 / (c1 ** 0.5)
    wgt = jax.random.uniform(kw, (c2, c1, 1, 1), dtype, -bound, bound)
    bias = jax.random.uniform(kb, (c2,), dtype, -bound, bound)
    return x, wgt, bias


if __name__ == "__main__":
    key = jax.random.PRNGKey(0)
    k1, k2, k3, k4 = jax.random.split(key, 4)

    # Case 1: canonical small shape — Classify(c1=4, c2=8) on (2, 4, 16, 16).
    x, wgt, bias = _make_case(k1, 2, 4, 16, 16, 8)
    out = classify_forward_module(x, wgt, bias)
    jax.block_until_ready(out)
    ref = reference_forward(x, wgt, bias)
    assert out.shape == (2, 8), out.shape
    assert jnp.allclose(out, ref, atol=1e-5, rtol=1e-4), "case 1 mismatch"

    # Case 2: ragged HW tail + 2-way reduction split (forced small tile).
    x, wgt, bias = _make_case(k2, 1, 4, 13, 13, 8)
    out = classify_forward_module(x, wgt, bias, max_tile_hw=128)
    jax.block_until_ready(out)
    ref = reference_forward(x, wgt, bias)
    assert out.shape == (1, 8), out.shape
    assert jnp.allclose(out, ref, atol=1e-5, rtol=1e-4), "case 2 mismatch"

    # Case 3: batch not a multiple of 8, hw < 128 (single masked chunk).
    x, wgt, bias = _make_case(k3, 6, 8, 10, 10, 8)
    out = classify_forward_module(x, wgt, bias)
    jax.block_until_ready(out)
    ref = reference_forward(x, wgt, bias)
    assert out.shape == (6, 8), out.shape
    assert jnp.allclose(out, ref, atol=1e-5, rtol=1e-4), "case 3 mismatch"

    # Case 4: list-of-feature-maps input (channel concat path of the module).
    ka, kb_, kw4 = jax.random.split(k4, 3)
    x_list = [jax.random.normal(ka, (2, 3, 9, 9), jnp.float32),
              jax.random.normal(kb_, (2, 5, 7, 7), jnp.float32)]
    kww, kbb = jax.random.split(kw4)
    bound = 1.0 / (8 ** 0.5)
    wgt = jax.random.uniform(kww, (8, 8, 1, 1), jnp.float32, -bound, bound)
    bias = jax.random.uniform(kbb, (8,), jnp.float32, -bound, bound)
    out = classify_forward_module(x_list, wgt, bias)
    jax.block_until_ready(out)
    ref = reference_forward(x_list, wgt, bias)
    assert out.shape == (2, 8), out.shape
    assert jnp.allclose(out, ref, atol=1e-5, rtol=1e-4), "case 4 mismatch"

    print("KERNEL_OK")
</pallas_src>

<mosaic_0001>
module attributes {stable_mosaic.version = 11 : i64} {
  func.func @_classify_kernel(%arg0: i32, %arg1: i32, %arg2: i32, %arg3: memref<2x4x256xf32, #tpu.memory_space<vmem>>, %arg4: memref<4x128xf32, #tpu.memory_space<vmem>>, %arg5: memref<1x128xf32, #tpu.memory_space<vmem>>, %arg6: memref<1x2x128xf32, #tpu.memory_space<vmem>>, %arg7: memref<2x4x128xf32, #tpu.memory_space<vmem>>) attributes {dimension_semantics = [#tpu.dimension_semantics<parallel>, #tpu.dimension_semantics<parallel>, #tpu.dimension_semantics<arbitrary>], iteration_bounds = array<i64: 1, 1, 1>, scalar_prefetch = 0 : i64, scratch_operands = 1 : i64, tpu.core_type = #tpu.core_type<tc>, window_params = [{transform_indices = @transform_0, window_bounds = array<i64: 2, 4, 256>}, {pipeline_mode = #tpu.pipeline_mode<synchronous>, transform_indices = @transform_1, window_bounds = array<i64: 4, 128>}, {pipeline_mode = #tpu.pipeline_mode<synchronous>, transform_indices = @transform_2, window_bounds = array<i64: 1, 128>}, {transform_indices = @transform_3, window_bounds = array<i64: 1, 2, 128>}]} {
    %c0 = arith.constant 0 : index
    %c0_0 = arith.constant 0 : index
    %c0_1 = arith.constant 0 : index
    %0 = vector.load %arg3[%c0, %c0_0, %c0_1] : memref<2x4x256xf32, #tpu.memory_space<vmem>>, vector<2x4x128xf32>
    %c0_2 = arith.constant 0 : index
    %c0_3 = arith.constant 0 : index
    %c128 = arith.constant 128 : index
    %1 = vector.load %arg3[%c0_2, %c0_3, %c128] : memref<2x4x256xf32, #tpu.memory_space<vmem>>, vector<2x4x128xf32>
    %2 = arith.addf %0, %1 : vector<2x4x128xf32>
    %c0_i32 = arith.constant 0 : i32
    %3 = arith.cmpi eq, %arg2, %c0_i32 : i32
    %4 = arith.extui %3 : i1 to i32
    %c0_i32_4 = arith.constant 0 : i32
    %5 = arith.cmpi ne, %4, %c0_i32_4 : i32
    scf.if %5 {
      %c0_9 = arith.constant 0 : index
      %c0_10 = arith.constant 0 : index
      %c0_11 = arith.constant 0 : index
      %12 = vector.load %arg7[%c0_9, %c0_10, %c0_11] : memref<2x4x128xf32, #tpu.memory_space<vmem>>, vector<2x4x128xf32>
      tpu.vector_store %arg7[%c0_9, %c0_10, %c0_11], %2 {strides = array<i32>} : memref<2x4x128xf32, #tpu.memory_space<vmem>>, vector<2x4x128xf32>,
    } else {
    }
    %c0_i32_5 = arith.constant 0 : i32
    %6 = arith.cmpi ne, %arg2, %c0_i32_5 : i32
    %7 = arith.extui %6 : i1 to i32
    %c0_i32_6 = arith.constant 0 : i32
    %8 = arith.cmpi ne, %7, %c0_i32_6 : i32
    scf.if %8 {
      %c0_9 = arith.constant 0 : index
      %c0_10 = arith.constant 0 : index
      %c0_11 = arith.constant 0 : index
      %12 = vector.load %arg7[%c0_9, %c0_10, %c0_11] : memref<2x4x128xf32, #tpu.memory_space<vmem>>, vector<2x4x128xf32>
      %13 = arith.addf %12, %2 : vector<2x4x128xf32>
      %c0_12 = arith.constant 0 : index
      %c0_13 = arith.constant 0 : index
      %c0_14 = arith.constant 0 : index
      %14 = vector.load %arg7[%c0_12, %c0_13, %c0_14] : memref<2x4x128xf32, #tpu.memory_space<vmem>>, vector<2x4x128xf32>
      tpu.vector_store %arg7[%c0_12, %c0_13, %c0_14], %13 {strides = array<i32>} : memref<2x4x128xf32, #tpu.memory_space<vmem>>, vector<2x4x128xf32>,
    } else {
    }
    %c0_i32_7 = arith.constant 0 : i32
    %9 = arith.cmpi eq, %arg2, %c0_i32_7 : i32
    %10 = arith.extui %9 : i1 to i32
    %c0_i32_8 = arith.constant 0 : i32
    %11 = arith.cmpi ne, %10, %c0_i32_8 : i32
    scf.if %11 {
      %c0_9 = arith.constant 0 : index
      %c0_10 = arith.constant 0 : index
      %c0_11 = arith.constant 0 : index
      %12 = vector.load %arg7[%c0_9, %c0_10, %c0_11] : memref<2x4x128xf32, #tpu.memory_space<vmem>>, vector<2x4x128xf32>
      %cst = arith.constant dense<0.000000e+00> : vector<2x4xf32>
      %13 = vector.multi_reduction <add>, %12, %cst [2] : vector<2x4x128xf32> to vector<2x4xf32>
      %cst_12 = arith.constant 3.906250e-03 : f32
      %14 = vector.broadcast %cst_12 : f32 to vector<2x4xf32>
      %15 = arith.mulf %13, %14 : vector<2x4xf32>
      %c0_13 = arith.constant 0 : index
      %c0_14 = arith.constant 0 : index
      %16 = vector.load %arg4[%c0_13, %c0_14] : memref<4x128xf32, #tpu.memory_space<vmem>>, vector<4x128xf32>
      %cst_15 = arith.constant dense<0.000000e+00> : vector<2x128xf32>
      %17 = tpu.matmul %15, %16, %cst_15 {dimension_numbers = #tpu.dot_dimension_numbers<[1], [0], [0], [1], [0, 0, 1, 1], [], []>} : vector<2x4xf32>, vector<4x128xf32>, vector<2x128xf32> -> vector<2x128xf32>
      %c0_16 = arith.constant 0 : index
      %c0_17 = arith.constant 0 : index
      %18 = vector.load %arg5[%c0_16, %c0_17] : memref<1x128xf32, #tpu.memory_space<vmem>>, vector<1x128xf32>
      %19 = vector.broadcast %18 : vector<1x128xf32> to vector<2x128xf32>
      %20 = arith.addf %17, %19 : vector<2x128xf32>
      %21 = vector.shape_cast %20 : vector<2x128xf32> to vector<1x2x128xf32>
      %c0_18 = arith.constant 0 : index
      %c0_19 = arith.constant 0 : index
      %c0_20 = arith.constant 0 : index
      %22 = vector.load %arg6[%c0_18, %c0_19, %c0_20] : memref<1x2x128xf32, #tpu.memory_space<vmem>>, vector<1x2x128xf32>
      tpu.vector_store %arg6[%c0_18, %c0_19, %c0_20], %21 {strides = array<i32>} : memref<1x2x128xf32, #tpu.memory_space<vmem>>, vector<1x2x128xf32>,
    } else {
    }
    return
  }
  func.func @transform_0(%arg0: i32, %arg1: i32, %arg2: i32) -> (i32, i32, i32) {
    %c1_i32 = arith.constant 1 : i32
    %0 = arith.muli %arg0, %c1_i32 : i32
    %1 = arith.addi %0, %arg2 : i32
    %c0_i32 = arith.constant 0 : i32
    %c0_i32_0 = arith.constant 0 : i32
    return %arg1, %c0_i32, %1 : i32, i32, i32
  }
  func.func @transform_1(%arg0: i32, %arg1: i32, %arg2: i32) -> (i32, i32) {
    %c0_i32 = arith.constant 0 : i32
    %c0_i32_0 = arith.constant 0 : i32
    %c0_i32_1 = arith.constant 0 : i32
    return %c0_i32, %c0_i32_0 : i32, i32
  }
  func.func @transform_2(%arg0: i32, %arg1: i32, %arg2: i32) -> (i32, i32) {
    %c0_i32 = arith.constant 0 : i32
    %c0_i32_0 = arith.constant 0 : i32
    %c0_i32_1 = arith.constant 0 : i32
    return %c0_i32, %c0_i32_0 : i32, i32
  }
  func.func @transform_3(%arg0: i32, %arg1: i32, %arg2: i32) -> (i32, i32, i32) {
    %c0_i32 = arith.constant 0 : i32
    %c0_i32_0 = arith.constant 0 : i32
    return %arg0, %arg1, %c0_i32 : i32, i32, i32
  }
}

</mosaic_0001>

<llo_original>
// kernel: tpu_custom_call.1
$region0: #{tpu_custom_call.1}
  #allocation0 [shape = 'u32[]', space=smem, size = 0x4, offset = 0x4, fixed_abs, tag = 'smem constant byte address 0x4 - core index']
  #allocation1 [shape = 'u32[144,128]{1,0:T(1,128)}', space=vmem, size = 0x12000, scoped, tag = 'internal scratch']
  #allocation2 [shape = 'f32[2,4,128]{2,1,0:T(4,128)}', space=vmem, size = 0x1000, scoped, tag = 'scratch operand']
  %s0 = inlined_call_operand.hbm [shape: f32[2,4,256], index: 0, kind: input, shape index: {}]
  %s1 = inlined_call_operand.hbm [shape: f32[4,128], index: 1, kind: input, shape index: {}]
  %s2 = inlined_call_operand.vmem [shape: f32[1,128], index: 2, kind: input, shape index: {}]
  %s3 = inlined_call_operand.hbm [shape: f32[1,2,128], index: 3, kind: output, shape index: {}]
  %s4 = sld [smem:[#allocation0]]
  $region42: #{tpu_custom_call.1} parent=0
    _
  %s6 = ssub.s32 1, %s4
  %s7 = scalar_select 0, %s6, %s4
  $region1: #{tpu_custom_call.1} parent=0
    #allocation3 [shape = 'u8[8192]{0}', space=vmem, size = 0x2000, scoped, tag = 'input window, operand 0, single buffered']
    #allocation4 [shape = 's32[1]{0}', space=sflag, size = 0x4, scoped, tag = 'scoped memory for tpu_custom_call.1']
    #allocation5 [shape = 's32[1]{0}', space=sflag, size = 0x4, scoped, tag = 'scoped memory for tpu_custom_call.1']
    #allocation6 [shape = 'u8[2048]{0}', space=vmem, size = 0x800, scoped, tag = 'input window, operand 1, single buffered']
    #allocation7 [shape = 's32[1]{0}', space=sflag, size = 0x4, scoped, tag = 'scoped memory for tpu_custom_call.1']
    #allocation8 [shape = 'u8[1024]{0}', space=vmem, size = 0x400, scoped, tag = 'output window, operand 0, single buffered']
    %8 = vsyncpa [#allocation4], 0
    %9 = vsyncpa [#allocation7], 0
    %10 = vsyncpa [#allocation5], 0
    // Predicated region
    $region2: #{tpu_custom_call.1} parent=1 // pred_check
      _
    $region3: #{tpu_custom_call.1} parent=1 // pred_check_branch
      %12 = sbr.rel (0) target = $region5
    $region4: #{tpu_custom_call.1} parent=1 // pred_region
      %s13 = sadd.s32 0, 0
      %s14 = smul.u32 2, %s13
      %s16 = ssub.s32 256, 256
      %17 = vsyncadd [#allocation4], %s16
      %s18 = smul.addr %s14, 64
      %s19 = scalar_lea.hbm %s0, %s18
      %s20 = sshll.u32 [#allocation3], 4
      %s21 = int_to_ptr.vmem [resolvable:$true] %s20
      %26 = dma.hbm_to_vmem [thread:$0]  %s19, 256, %s21, [#allocation4], 128, 128, 8
    $region5: #{tpu_custom_call.1} parent=1 // pred_fallthru
      _
    // Predicated region
    $region6: #{tpu_custom_call.1} parent=1 // pred_check
      _
    $region7: #{tpu_custom_call.1} parent=1 // pred_check_branch
      %28 = sbr.rel (0) target = $region9
    $region8: #{tpu_custom_call.1} parent=1 // pred_region
      %s30 = ssub.s32 64, 64
      %31 = vsyncadd [#allocation7], %s30
      %s33 = sshll.u32 [#allocation6], 4
      %s34 = int_to_ptr.vmem [resolvable:$true] %s33
      %36 = dma.hbm_to_vmem [thread:$0]  %s1, 64, %s34, [#allocation7]
    $region9: #{tpu_custom_call.1} parent=1 // pred_fallthru
      _
    // Predicated region
    $region10: #{tpu_custom_call.1} parent=1 // pred_check
      _
    $region11: #{tpu_custom_call.1} parent=1 // pred_check_branch
      %38 = sbr.rel (0) target = $region13
    $region12: #{tpu_custom_call.1} parent=1 // pred_region
      _
    $region13: #{tpu_custom_call.1} parent=1 // pred_fallthru
      _
    // Predicated region
    $region14: #{tpu_custom_call.1} parent=1 // pred_check
      _
    $region15: #{tpu_custom_call.1} parent=1 // pred_check_branch
      %40 = sbr.rel (0) target = $region17
    $region16: #{tpu_custom_call.1} parent=1 // pred_region
      %41 = dma.done [#allocation4], 256
    $region17: #{tpu_custom_call.1} parent=1 // pred_fallthru
      _
    // Predicated region
    $region18: #{tpu_custom_call.1} parent=1 // pred_check
      _
    $region19: #{tpu_custom_call.1} parent=1 // pred_check_branch
      %43 = sbr.rel (0) target = $region21
    $region20: #{tpu_custom_call.1} parent=1 // pred_region
      %44 = dma.done [#allocation7], 64
    $region21: #{tpu_custom_call.1} parent=1 // pred_fallthru
      _
    %s45 = sadd.s32 0, 0
    %s46 = smul.u32 2, %s45
    %v47 = vld [vmem:[#allocation3] sm:$0xf]
    %v48 = vld [vmem:[#allocation3 + $0x8] sm:$0xf]
    %v49 = vld [vmem:[#allocation3 + $0x4] sm:$0xf]
    %v50 = vld [vmem:[#allocation3 + $0xc] sm:$0xf]
    %v51 = vadd.f32 %v47, %v49
    %v52 = vadd.f32 %v48, %v50
    %p53 = scmp.eq.s32.totalorder 0, 0
    // Predicated region
    $region22: #{tpu_custom_call.1} parent=1 // pred_check
      %p54 = pneg %p53
    $region23: #{tpu_custom_call.1} parent=1 // pred_check_branch
      %56 = sbr.rel (%p54) target = $region25
    $region24: #{tpu_custom_call.1} parent=1 // pred_region
      %57 = vst [vmem:[#allocation2] sm:$0xf] %v51
      %58 = vst [vmem:[#allocation2 + $0x4] sm:$0xf] %v52
    $region25: #{tpu_custom_call.1} parent=1 // pred_fallthru
      _
    %p59 = scmp.ne.s32.totalorder 0, 0
    // Predicated region
    $region26: #{tpu_custom_call.1} parent=1 // pred_check
      %p60 = pneg %p59
    $region27: #{tpu_custom_call.1} parent=1 // pred_check_branch
      %62 = sbr.rel (%p60) target = $region29
    $region28: #{tpu_custom_call.1} parent=1 // pred_region
      %v63 = vld [vmem:[#allocation2] sm:$0xf]
      %v64 = vld [vmem:[#allocation2 + $0x4] sm:$0xf]
      %v65 = vadd.f32 %v63, %v51
      %v66 = vadd.f32 %v64, %v52
      %67 = vst [vmem:[#allocation2] sm:$0xf] %v65
      %68 = vst [vmem:[#allocation2 + $0x4] sm:$0xf] %v66
    $region29: #{tpu_custom_call.1} parent=1 // pred_fallthru
      _
    // Predicated region
    $region30: #{tpu_custom_call.1} parent=1 // pred_check
      %p69 = pneg %p53
    $region31: #{tpu_custom_call.1} parent=1 // pred_check_branch
      %71 = sbr.rel (%p69) target = $region33
    $region32: #{tpu_custom_call.1} parent=1 // pred_region
      %v72 = vld [vmem:[#allocation2] sm:$0xf]
      %v73 = vld [vmem:[#allocation2 + $0x4] sm:$0xf]
      %vm74 = vcmask 1043456
      %v75 = vsel %vm74, %v72, 0.0
      %76 = vadd.xlane.f32.xlu0 %v75
      %v77 = vpop.xlane.xlu0 %76
      %v78 = vsel %vm74, %v73, 0.0
      %79 = vadd.xlane.f32.xlu0 %v78
      %v80 = vpop.xlane.xlu0 %79
      %v81 = vmul.f32 %v77, 0.00390625
      %v82 = vmul.f32 %v80, 0.00390625
      %v83 = vld [vmem:[#allocation6] sm:$0xf]
      %v84 = vld [vmem:[%s2] sm:$0x1]
      %v86 = vlaneseq
      %v87 = vshrl.u32 %v86, 7
      %v88 = vsub.s32 0, %v87
      %v89 = vrot.slane %v84, %v88
      %v93 = vlaneseq
      %v94 = vand.u32 %v93, 127
      %v95 = vlaneseq
      %v96 = vshrl.u32 %v95, 7
      %v97 = vsub.s32 %v94, %v96
      %v98 = vrot.slane %v81, %v97
      %v99 = vlaneseq
      %v100 = vshrl.u32 %v99, 7
      %v101 = vsub.s32 %v94, %v100
      %v102 = vrot.slane %v82, %v101
      %vm103 = vcmask 1041409
      %v104 = vsel %vm103, %v102, %v98
      %vm105 = vcmask 31744
      %v106 = vsel %vm105, %v104, 0
      %v109 = vsel %vm74, %v83, 0
      %111 = vmatprep.subr.mxu0 0.0
      %112 = vmatpush1.msra.mxu0 %v109
      %113 = vmatprep.subr.mxu0 0.0
      %114 = vmatpush1.msra.mxu0 0.0
      %115 = vmatprep.subr.mxu0 0.0
      %116 = vmatpush1.msra.mxu0 0.0
      %117 = vmatprep.subr.mxu0 0.0
      %118 = vmatpush1.msra.mxu0 0.0
      %119 = vmatprep.subr.mxu0 0.0
      %120 = vmatpush1.msra.mxu0 0.0
      %121 = vmatprep.subr.mxu0 0.0
      %122 = vmatpush1.msra.mxu0 0.0
      %123 = vmatprep.subr.mxu0 0.0
      %124 = vmatpush1.msra.mxu0 0.0
      %125 = vmatprep.subr.mxu0 0.0
      %126 = vmatpush1.msra.mxu0 0.0
      %127 = vmatprep.subr.mxu0 0.0
      %128 = vmatpush1.msra.mxu0 0.0
      %129 = vmatprep.subr.mxu0 0.0
      %130 = vmatpush1.msra.mxu0 0.0
      %131 = vmatprep.subr.mxu0 0.0
      %132 = vmatpush1.msra.mxu0 0.0
      %133 = vmatprep.subr.mxu0 0.0
      %134 = vmatpush1.msra.mxu0 0.0
      %135 = vmatprep.subr.mxu0 0.0
      %136 = vmatpush1.msra.mxu0 0.0
      %137 = vmatprep.subr.mxu0 0.0
      %138 = vmatpush1.msra.mxu0 0.0
      %139 = vmatprep.subr.mxu0 0.0
      %140 = vmatpush1.msra.mxu0 0.0
      %141 = vmatprep.subr.mxu0 0.0
      %142 = vmatpush1.msra.mxu0 0.0
      %143 = vmatprep.subr.mxu0 0.0
      %144 = vmatpush1.msra.mxu0 0.0
      %145 = vmatprep.subr.mxu0 0.0
      %146 = vmatpush1.msra.mxu0 0.0
      %147 = vmatprep.subr.mxu0 0.0
      %148 = vmatpush1.msra.mxu0 0.0
      %149 = vmatprep.subr.mxu0 0.0
      %150 = vmatpush1.msra.mxu0 0.0
      %151 = vmatprep.subr.mxu0 0.0
      %152 = vmatpush1.msra.mxu0 0.0
      %153 = vmatprep.subr.mxu0 0.0
      %154 = vmatpush1.msra.mxu0 0.0
      %155 = vmatprep.subr.mxu0 0.0
      %156 = vmatpush1.msra.mxu0 0.0
      %157 = vmatprep.subr.mxu0 0.0
      %158 = vmatpush1.msra.mxu0 0.0
      %159 = vmatprep.subr.mxu0 0.0
      %160 = vmatpush1.msra.mxu0 0.0
      %161 = vmatprep.subr.mxu0 0.0
      %162 = vmatpush1.msra.mxu0 0.0
      %163 = vmatprep.subr.mxu0 0.0
      %164 = vmatpush1.msra.mxu0 0.0
      %165 = vmatprep.subr.mxu0 0.0
      %166 = vmatpush1.msra.mxu0 0.0
      %167 = vmatprep.subr.mxu0 0.0
      %168 = vmatpush1.msra.mxu0 0.0
      %169 = vmatprep.subr.mxu0 0.0
      %170 = vmatpush1.msra.mxu0 0.0
      %171 = vmatprep.subr.mxu0 0.0
      %172 = vmatpush1.msra.mxu0 0.0
      %173 = vmatprep.subr.mxu0 0.0
      %174 = vmatpush1.msra.mxu0 0.0
      %175 = vmatprep.mubr.f32.mxu0 0.0
      %176 = vmatmul.mubr.f32.gmra.mrb[0].mxu0 %v106
      %v177 = vpop.f32.mrb[0].mxu0
      %v178 = vadd.f32 %v89, %v177
      %v179 = vpop.f32.mrb[0].mxu0
      %180 = vdwg.mxu0
      %181 = vst [vmem:[#allocation8] sm:$0x3] %v178
    $region33: #{tpu_custom_call.1} parent=1 // pred_fallthru
      _
    // Predicated region
    $region34: #{tpu_custom_call.1} parent=1 // pred_check
      _
    $region35: #{tpu_custom_call.1} parent=1 // pred_check_branch
      %183 = sbr.rel (0) target = $region37
    $region36: #{tpu_custom_call.1} parent=1 // pred_region
      %s185 = ssub.s32 32, 32
      %186 = vsyncadd [#allocation5], %s185
      %s188 = sshll.u32 [#allocation8], 4
      %s189 = int_to_ptr.vmem [resolvable:$true] %s188
      %191 = dma.vmem_to_hbm [thread:$0]  %s189, 32, %s3, [#allocation5]
    $region37: #{tpu_custom_call.1} parent=1 // pred_fallthru
      _
    // Predicated region
    $region38: #{tpu_custom_call.1} parent=1 // pred_check
      _
    $region39: #{tpu_custom_call.1} parent=1 // pred_check_branch
      %193 = sbr.rel (0) target = $region41
    $region40: #{tpu_custom_call.1} parent=1 // pred_region
      %194 = dma.done [#allocation5], 32
    $region41: #{tpu_custom_call.1} parent=1 // pred_fallthru
      _
    %195 = vsyncpa [#allocation4], 1
    %196 = vsyncpa [#allocation7], 1
    %197 = vsyncpa [#allocation5], 1

</llo_original>
